<compile_context>
chip_gen: v7x
topology: tpu7x:2x2x1
jax: 0.10.0
libtpu: 0.0.40
codegen_flags: <defaults>
</compile_context>

<pallas_src>
import functools

import jax
import jax.numpy as jnp
from jax.experimental import pallas as pl
from jax.experimental.pallas import tpu as pltpu

EPS = 1e-5


# --------------------------------------------------------------------------
# in-kernel helpers
# --------------------------------------------------------------------------
def _im2col_3x3(a, Hh, Wh):
    """a: (Hh, Wh, C) f32 -> (Hh*Wh, 9*C) rows of zero-padded 3x3 windows.

    Column order is (ky, kx, c), matching w.reshape(9*C, Cout) for HWIO weights.
    The 1-pixel halo is built in registers (no padded VMEM scratch, no masked
    partial stores).
    """
    C = a.shape[-1]
    zrow = jnp.zeros((1, Wh, C), a.dtype)
    ap = jnp.concatenate([zrow, a, zrow], axis=0)          # (Hh+2, Wh, C)
    zcol = jnp.zeros((Hh + 2, 1, C), a.dtype)
    ap = jnp.concatenate([zcol, ap, zcol], axis=1)         # (Hh+2, Wh+2, C)
    taps = []
    for ky in range(3):
        for kx in range(3):
            taps.append(ap[ky:ky + Hh, kx:kx + Wh, :].reshape(Hh * Wh, C))
    return jnp.concatenate(taps, axis=-1)                  # (Hh*Wh, 9*C)


def _bn_affine(st_all, g, be, rows_per_batch):
    """Fold per-batch [sum; sumsq] partials into BN scale/shift (training mode).

    st_all: (B, 2, C) f32 partials; g, be: (1, C). Returns (scale, shift), (1, C).
    """
    cnt = st_all.shape[0] * rows_per_batch
    s = jnp.sum(st_all, axis=0)                            # (2, C)
    mu = s[0:1, :] * (1.0 / cnt)                           # (1, C)
    var = s[1:2, :] * (1.0 / cnt) - mu * mu                # biased variance
    scale = g * jax.lax.rsqrt(var + EPS)
    shift = be - mu * scale
    return scale, shift


# --------------------------------------------------------------------------
# kernels (grid = (B,), one batch element per grid step)
# --------------------------------------------------------------------------
def _pool_conv1_kernel(x_ref, w_ref, b_ref, y_ref, st_ref, *, Hh, Wh):
    # x_ref: (1, Hh, 2, Wh, 2, Cin); w_ref: (9*Cin, Cout) bf16; b_ref: (1, Cout)
    x = x_ref[...]
    xp = jnp.maximum(
        jnp.maximum(x[0, :, 0, :, 0, :], x[0, :, 0, :, 1, :]),
        jnp.maximum(x[0, :, 1, :, 0, :], x[0, :, 1, :, 1, :]))     # (Hh, Wh, Cin)

    patch = _im2col_3x3(xp, Hh, Wh)                                # (N, 9*Cin)
    y = jnp.dot(patch.astype(jnp.bfloat16), w_ref[...],
                preferred_element_type=jnp.float32) + b_ref[...]   # (N, Cout) f32

    Cout = y.shape[-1]
    y_ref[...] = y.reshape(1, Hh * Wh, Cout)
    s = jnp.sum(y, axis=0, keepdims=True)
    ss = jnp.sum(y * y, axis=0, keepdims=True)
    st_ref[...] = jnp.concatenate([s, ss], axis=0).reshape(1, 2, Cout)


def _bn_relu_conv2_kernel(y1_ref, st1_ref, g_ref, be_ref, w_ref, b_ref,
                          y2_ref, st2_ref, *, Hh, Wh):
    N = Hh * Wh
    scale, shift = _bn_affine(st1_ref[...], g_ref[...], be_ref[...], N)
    h = jnp.maximum(y1_ref[...][0] * scale + shift, 0.0)           # (N, Cout)

    Cout = h.shape[-1]
    patch = _im2col_3x3(h.reshape(Hh, Wh, Cout), Hh, Wh)           # (N, 9*Cout)
    y = jnp.dot(patch.astype(jnp.bfloat16), w_ref[...],
                preferred_element_type=jnp.float32) + b_ref[...]   # (N, Cout) f32

    y2_ref[...] = y.reshape(1, N, Cout)
    s = jnp.sum(y, axis=0, keepdims=True)
    ss = jnp.sum(y * y, axis=0, keepdims=True)
    st2_ref[...] = jnp.concatenate([s, ss], axis=0).reshape(1, 2, Cout)


def _bn_relu_out_kernel(y2_ref, st2_ref, g_ref, be_ref, out_ref, *, Hh, Wh):
    N = Hh * Wh
    scale, shift = _bn_affine(st2_ref[...], g_ref[...], be_ref[...], N)
    h = jnp.maximum(y2_ref[...][0] * scale + shift, 0.0)           # (N, Cout)
    out_ref[...] = h.reshape(1, Hh, Wh, h.shape[-1])


# --------------------------------------------------------------------------
# wrapper
# --------------------------------------------------------------------------
def conv_down(x_nchw, params):
    """Forward pass of convDown. x_nchw: (B, Cin, H, W) float32. Returns NCHW."""
    w1, b1, g1, be1, w2, b2, g2, be2 = params
    B, Cin, H, W = x_nchw.shape
    Hh, Wh = H // 2, W // 2
    Cout = w1.shape[-1]
    N = Hh * Wh

    # NCHW -> NHWC with the 2x2 pooling windows split out (pure layout glue).
    # TODO(synk): for very large inputs also tile spatially (row-block halo) and
    #             fold the NCHW<->NHWC conversion into the kernel layout.
    x = jnp.transpose(x_nchw, (0, 2, 3, 1)).reshape(B, Hh, 2, Wh, 2, Cin)
    w1m = w1.reshape(9 * Cin, Cout).astype(jnp.bfloat16)   # rows: (ky*3+kx)*Cin + ci
    w2m = w2.reshape(9 * Cout, Cout).astype(jnp.bfloat16)
    b1r, g1r, be1r = b1.reshape(1, Cout), g1.reshape(1, Cout), be1.reshape(1, Cout)
    b2r, g2r, be2r = b2.reshape(1, Cout), g2.reshape(1, Cout), be2.reshape(1, Cout)

    cparams = pltpu.CompilerParams(dimension_semantics=("parallel",))

    def cspec():   # broadcast (1, Cout) per-channel parameter
        return pl.BlockSpec((1, Cout), lambda b: (0, 0))

    def yspec():   # per-batch (N, Cout) activation slab
        return pl.BlockSpec((1, N, Cout), lambda b: (b, 0, 0))

    def stspec():  # per-batch [sum; sumsq] BN partials
        return pl.BlockSpec((1, 2, Cout), lambda b: (b, 0, 0))

    # Pass 1: maxpool 2x2 + conv1 (+bias); emit per-batch BN1 partial stats.
    y1, st1 = pl.pallas_call(
        functools.partial(_pool_conv1_kernel, Hh=Hh, Wh=Wh),
        grid=(B,),
        in_specs=[
            pl.BlockSpec((1, Hh, 2, Wh, 2, Cin), lambda b: (b, 0, 0, 0, 0, 0)),
            pl.BlockSpec((9 * Cin, Cout), lambda b: (0, 0)),
            cspec(),
        ],
        out_specs=(yspec(), stspec()),
        out_shape=(jax.ShapeDtypeStruct((B, N, Cout), jnp.float32),
                   jax.ShapeDtypeStruct((B, 2, Cout), jnp.float32)),
        compiler_params=cparams,
    )(x, w1m, b1r)

    # Pass 2: BN1 (global stats) + ReLU + conv2 (+bias); per-batch BN2 partials.
    y2, st2 = pl.pallas_call(
        functools.partial(_bn_relu_conv2_kernel, Hh=Hh, Wh=Wh),
        grid=(B,),
        in_specs=[
            yspec(),
            pl.BlockSpec((B, 2, Cout), lambda b: (0, 0, 0)),
            cspec(), cspec(),
            pl.BlockSpec((9 * Cout, Cout), lambda b: (0, 0)),
            cspec(),
        ],
        out_specs=(yspec(), stspec()),
        out_shape=(jax.ShapeDtypeStruct((B, N, Cout), jnp.float32),
                   jax.ShapeDtypeStruct((B, 2, Cout), jnp.float32)),
        compiler_params=cparams,
    )(y1, st1, g1r, be1r, w2m, b2r)

    # Pass 3: BN2 (global stats) + ReLU -> NHWC output.
    out_nhwc = pl.pallas_call(
        functools.partial(_bn_relu_out_kernel, Hh=Hh, Wh=Wh),
        grid=(B,),
        in_specs=[
            yspec(),
            pl.BlockSpec((B, 2, Cout), lambda b: (0, 0, 0)),
            cspec(), cspec(),
        ],
        out_specs=pl.BlockSpec((1, Hh, Wh, Cout), lambda b: (b, 0, 0, 0)),
        out_shape=jax.ShapeDtypeStruct((B, Hh, Wh, Cout), jnp.float32),
        compiler_params=cparams,
    )(y2, st2, g2r, be2r)

    return jnp.transpose(out_nhwc, (0, 3, 1, 2))   # back to NCHW


# --------------------------------------------------------------------------
# plain-JAX reference (matches PyTorch training-mode forward semantics)
# --------------------------------------------------------------------------
def ref_forward(x, params):
    w1, b1, g1, be1, w2, b2, g2, be2 = params
    B, Cin, H, W = x.shape
    xp = jnp.max(x.reshape(B, Cin, H // 2, 2, W // 2, 2), axis=(3, 5))

    def conv_bn_relu(h, w, b, g, be):
        wk = jnp.transpose(w, (3, 2, 0, 1))  # (3,3,Ci,Co) -> OIHW
        y = jax.lax.conv_general_dilated(
            h, wk, window_strides=(1, 1), padding=((1, 1), (1, 1)),
            dimension_numbers=('NCHW', 'OIHW', 'NCHW'))
        y = y + b[None, :, None, None]
        mu = jnp.mean(y, axis=(0, 2, 3), keepdims=True)
        var = jnp.mean((y - mu) ** 2, axis=(0, 2, 3), keepdims=True)
        y = (y - mu) * jax.lax.rsqrt(var + EPS) \
            * g[None, :, None, None] + be[None, :, None, None]
        return jnp.maximum(y, 0.0)

    h = conv_bn_relu(xp, w1, b1, g1, be1)
    h = conv_bn_relu(h, w2, b2, g2, be2)
    return h


if __name__ == "__main__":
    B, Cin, H, W = 2, 4, 16, 16   # small shapes consistent with the module
    Cout = 8                      # out_planes

    key = jax.random.PRNGKey(0)
    ks = jax.random.split(key, 9)
    x = jax.random.normal(ks[0], (B, Cin, H, W), jnp.float32)
    # deterministic synthetic parameters (shapes from nn.Conv2d / nn.BatchNorm2d)
    w1 = 0.1 * jax.random.normal(ks[1], (3, 3, Cin, Cout), jnp.float32)
    b1 = 0.1 * jax.random.normal(ks[2], (Cout,), jnp.float32)
    g1 = 1.0 + 0.1 * jax.random.normal(ks[3], (Cout,), jnp.float32)
    be1 = 0.1 * jax.random.normal(ks[4], (Cout,), jnp.float32)
    w2 = 0.1 * jax.random.normal(ks[5], (3, 3, Cout, Cout), jnp.float32)
    b2 = 0.1 * jax.random.normal(ks[6], (Cout,), jnp.float32)
    g2 = 1.0 + 0.1 * jax.random.normal(ks[7], (Cout,), jnp.float32)
    be2 = 0.1 * jax.random.normal(ks[8], (Cout,), jnp.float32)
    params = (w1, b1, g1, be1, w2, b2, g2, be2)

    out = conv_down(x, params)
    out = jax.block_until_ready(out)
    assert out.shape == (B, Cout, H // 2, W // 2), out.shape

    ref = jax.block_until_ready(ref_forward(x, params))
    # bf16 MXU operands with f32 accumulation -> slightly relaxed tolerance
    assert jnp.allclose(out, ref, atol=3e-2, rtol=3e-2), \
        float(jnp.max(jnp.abs(out - ref)))

    print("KERNEL_OK")
</pallas_src>

<mosaic_0001>
module attributes {stable_mosaic.version = 11 : i64} {
  func.func @_pool_conv1_kernel(%arg0: i32, %arg1: memref<1x8x2x8x2x4xf32, #tpu.memory_space<vmem>>, %arg2: memref<36x8xbf16, #tpu.memory_space<vmem>>, %arg3: memref<1x8xf32, #tpu.memory_space<vmem>>, %arg4: memref<1x64x8xf32, #tpu.memory_space<vmem>>, %arg5: memref<1x2x8xf32, #tpu.memory_space<vmem>>) attributes {dimension_semantics = [#tpu.dimension_semantics<parallel>], iteration_bounds = array<i64: 2>, scalar_prefetch = 0 : i64, scratch_operands = 0 : i64, tpu.core_type = #tpu.core_type<tc>, window_params = [{transform_indices = @transform_0, window_bounds = array<i64: 1, 8, 2, 8, 2, 4>}, {pipeline_mode = #tpu.pipeline_mode<synchronous>, transform_indices = @transform_1, window_bounds = array<i64: 36, 8>}, {pipeline_mode = #tpu.pipeline_mode<synchronous>, transform_indices = @transform_2, window_bounds = array<i64: 1, 8>}, {transform_indices = @transform_3, window_bounds = array<i64: 1, 64, 8>}, {transform_indices = @transform_4, window_bounds = array<i64: 1, 2, 8>}]} {
    %c0 = arith.constant 0 : index
    %c0_0 = arith.constant 0 : index
    %c0_1 = arith.constant 0 : index
    %c0_2 = arith.constant 0 : index
    %c0_3 = arith.constant 0 : index
    %c0_4 = arith.constant 0 : index
    %0 = vector.load %arg1[%c0, %c0_0, %c0_1, %c0_2, %c0_3, %c0_4] : memref<1x8x2x8x2x4xf32, #tpu.memory_space<vmem>>, vector<1x8x2x8x2x4xf32>
    %1 = vector.extract_strided_slice %0 {offsets = [0, 0, 0, 0, 0, 0], sizes = [1, 8, 1, 8, 1, 4], strides = [1, 1, 1, 1, 1, 1]} : vector<1x8x2x8x2x4xf32> to vector<1x8x1x8x1x4xf32>
    %2 = vector.shape_cast %1 : vector<1x8x1x8x1x4xf32> to vector<8x8x4xf32>
    %3 = vector.extract_strided_slice %0 {offsets = [0, 0, 0, 0, 1, 0], sizes = [1, 8, 1, 8, 1, 4], strides = [1, 1, 1, 1, 1, 1]} : vector<1x8x2x8x2x4xf32> to vector<1x8x1x8x1x4xf32>
    %4 = vector.shape_cast %3 : vector<1x8x1x8x1x4xf32> to vector<8x8x4xf32>
    %5 = arith.maximumf %2, %4 : vector<8x8x4xf32>
    %6 = vector.extract_strided_slice %0 {offsets = [0, 0, 1, 0, 0, 0], sizes = [1, 8, 1, 8, 1, 4], strides = [1, 1, 1, 1, 1, 1]} : vector<1x8x2x8x2x4xf32> to vector<1x8x1x8x1x4xf32>
    %7 = vector.shape_cast %6 : vector<1x8x1x8x1x4xf32> to vector<8x8x4xf32>
    %8 = vector.extract_strided_slice %0 {offsets = [0, 0, 1, 0, 1, 0], sizes = [1, 8, 1, 8, 1, 4], strides = [1, 1, 1, 1, 1, 1]} : vector<1x8x2x8x2x4xf32> to vector<1x8x1x8x1x4xf32>
    %9 = vector.shape_cast %8 : vector<1x8x1x8x1x4xf32> to vector<8x8x4xf32>
    %10 = arith.maximumf %7, %9 : vector<8x8x4xf32>
    %11 = arith.maximumf %5, %10 : vector<8x8x4xf32>
    %cst = arith.constant 0.000000e+00 : f32
    %12 = vector.broadcast %cst : f32 to vector<1x8x4xf32>
    %13 = tpu.concatenate %12, %11, %12 in 0 : vector<1x8x4xf32>, vector<8x8x4xf32>, vector<1x8x4xf32> -> vector<10x8x4xf32>
    %cst_5 = arith.constant 0.000000e+00 : f32
    %14 = vector.broadcast %cst_5 : f32 to vector<10x1x4xf32>
    %15 = tpu.concatenate %14, %13, %14 in 1 : vector<10x1x4xf32>, vector<10x8x4xf32>, vector<10x1x4xf32> -> vector<10x10x4xf32>
    %16 = vector.extract_strided_slice %15 {offsets = [0, 0, 0], sizes = [8, 8, 4], strides = [1, 1, 1]} : vector<10x10x4xf32> to vector<8x8x4xf32>
    %17 = vector.shape_cast %16 : vector<8x8x4xf32> to vector<64x4xf32>
    %18 = vector.extract_strided_slice %15 {offsets = [0, 1, 0], sizes = [8, 8, 4], strides = [1, 1, 1]} : vector<10x10x4xf32> to vector<8x8x4xf32>
    %19 = vector.shape_cast %18 : vector<8x8x4xf32> to vector<64x4xf32>
    %20 = vector.extract_strided_slice %15 {offsets = [0, 2, 0], sizes = [8, 8, 4], strides = [1, 1, 1]} : vector<10x10x4xf32> to vector<8x8x4xf32>
    %21 = vector.shape_cast %20 : vector<8x8x4xf32> to vector<64x4xf32>
    %22 = vector.extract_strided_slice %15 {offsets = [1, 0, 0], sizes = [8, 8, 4], strides = [1, 1, 1]} : vector<10x10x4xf32> to vector<8x8x4xf32>
    %23 = vector.shape_cast %22 : vector<8x8x4xf32> to vector<64x4xf32>
    %24 = vector.extract_strided_slice %15 {offsets = [1, 1, 0], sizes = [8, 8, 4], strides = [1, 1, 1]} : vector<10x10x4xf32> to vector<8x8x4xf32>
    %25 = vector.shape_cast %24 : vector<8x8x4xf32> to vector<64x4xf32>
    %26 = vector.extract_strided_slice %15 {offsets = [1, 2, 0], sizes = [8, 8, 4], strides = [1, 1, 1]} : vector<10x10x4xf32> to vector<8x8x4xf32>
    %27 = vector.shape_cast %26 : vector<8x8x4xf32> to vector<64x4xf32>
    %28 = vector.extract_strided_slice %15 {offsets = [2, 0, 0], sizes = [8, 8, 4], strides = [1, 1, 1]} : vector<10x10x4xf32> to vector<8x8x4xf32>
    %29 = vector.shape_cast %28 : vector<8x8x4xf32> to vector<64x4xf32>
    %30 = vector.extract_strided_slice %15 {offsets = [2, 1, 0], sizes = [8, 8, 4], strides = [1, 1, 1]} : vector<10x10x4xf32> to vector<8x8x4xf32>
    %31 = vector.shape_cast %30 : vector<8x8x4xf32> to vector<64x4xf32>
    %32 = vector.extract_strided_slice %15 {offsets = [2, 2, 0], sizes = [8, 8, 4], strides = [1, 1, 1]} : vector<10x10x4xf32> to vector<8x8x4xf32>
    %33 = vector.shape_cast %32 : vector<8x8x4xf32> to vector<64x4xf32>
    %34 = tpu.concatenate %17, %19, %21, %23, %25, %27, %29, %31, %33 in 1 : vector<64x4xf32>, vector<64x4xf32>, vector<64x4xf32>, vector<64x4xf32>, vector<64x4xf32>, vector<64x4xf32>, vector<64x4xf32>, vector<64x4xf32>, vector<64x4xf32> -> vector<64x36xf32>
    %35 = arith.truncf %34 : vector<64x36xf32> to vector<64x36xbf16>
    %c0_6 = arith.constant 0 : index
    %c0_7 = arith.constant 0 : index
    %36 = vector.load %arg2[%c0_6, %c0_7] : memref<36x8xbf16, #tpu.memory_space<vmem>>, vector<36x8xbf16>
    %cst_8 = arith.constant dense<0.000000e+00> : vector<64x8xf32>
    %37 = tpu.matmul %35, %36, %cst_8 {dimension_numbers = #tpu.dot_dimension_numbers<[1], [0], [0], [1], [0, 0, 1, 1], [], []>} : vector<64x36xbf16>, vector<36x8xbf16>, vector<64x8xf32> -> vector<64x8xf32>
    %c0_9 = arith.constant 0 : index
    %c0_10 = arith.constant 0 : index
    %38 = vector.load %arg3[%c0_9, %c0_10] : memref<1x8xf32, #tpu.memory_space<vmem>>, vector<1x8xf32>
    %39 = vector.broadcast %38 : vector<1x8xf32> to vector<64x8xf32>
    %40 = arith.addf %37, %39 : vector<64x8xf32>
    %41 = vector.shape_cast %40 : vector<64x8xf32> to vector<1x64x8xf32>
    %c0_11 = arith.constant 0 : index
    %c0_12 = arith.constant 0 : index
    %c0_13 = arith.constant 0 : index
    %42 = vector.load %arg4[%c0_11, %c0_12, %c0_13] : memref<1x64x8xf32, #tpu.memory_space<vmem>>, vector<1x64x8xf32>
    tpu.vector_store %arg4[%c0_11, %c0_12, %c0_13], %41 {strides = array<i32>} : memref<1x64x8xf32, #tpu.memory_space<vmem>>, vector<1x64x8xf32>,
    %cst_14 = arith.constant dense<0.000000e+00> : vector<8xf32>
    %43 = vector.multi_reduction <add>, %40, %cst_14 [0] : vector<64x8xf32> to vector<8xf32>
    %44 = vector.shape_cast %43 : vector<8xf32> to vector<1x8xf32>
    %45 = arith.mulf %40, %40 : vector<64x8xf32>
    %cst_15 = arith.constant dense<0.000000e+00> : vector<8xf32>
    %46 = vector.multi_reduction <add>, %45, %cst_15 [0] : vector<64x8xf32> to vector<8xf32>
    %47 = vector.shape_cast %46 : vector<8xf32> to vector<1x8xf32>
    %48 = tpu.concatenate %44, %47 in 0 : vector<1x8xf32>, vector<1x8xf32> -> vector<2x8xf32>
    %49 = vector.shape_cast %48 : vector<2x8xf32> to vector<1x2x8xf32>
    %c0_16 = arith.constant 0 : index
    %c0_17 = arith.constant 0 : index
    %c0_18 = arith.constant 0 : index
    %50 = vector.load %arg5[%c0_16, %c0_17, %c0_18] : memref<1x2x8xf32, #tpu.memory_space<vmem>>, vector<1x2x8xf32>
    tpu.vector_store %arg5[%c0_16, %c0_17, %c0_18], %49 {strides = array<i32>} : memref<1x2x8xf32, #tpu.memory_space<vmem>>, vector<1x2x8xf32>,
    return
  }
  func.func @transform_0(%arg0: i32) -> (i32, i32, i32, i32, i32, i32) {
    %c0_i32 = arith.constant 0 : i32
    %c0_i32_0 = arith.constant 0 : i32
    %c0_i32_1 = arith.constant 0 : i32
    %c0_i32_2 = arith.constant 0 : i32
    %c0_i32_3 = arith.constant 0 : i32
    %c0_i32_4 = arith.constant 0 : i32
    return %arg0, %c0_i32, %c0_i32_0, %c0_i32_1, %c0_i32_2, %c0_i32_3 : i32, i32, i32, i32, i32, i32
  }
  func.func @transform_1(%arg0: i32) -> (i32, i32) {
    %c0_i32 = arith.constant 0 : i32
    %c0_i32_0 = arith.constant 0 : i32
    %c0_i32_1 = arith.constant 0 : i32
    return %c0_i32, %c0_i32_0 : i32, i32
  }
  func.func @transform_2(%arg0: i32) -> (i32, i32) {
    %c0_i32 = arith.constant 0 : i32
    %c0_i32_0 = arith.constant 0 : i32
    %c0_i32_1 = arith.constant 0 : i32
    return %c0_i32, %c0_i32_0 : i32, i32
  }
  func.func @transform_3(%arg0: i32) -> (i32, i32, i32) {
    %c0_i32 = arith.constant 0 : i32
    %c0_i32_0 = arith.constant 0 : i32
    %c0_i32_1 = arith.constant 0 : i32
    return %arg0, %c0_i32, %c0_i32_0 : i32, i32, i32
  }
  func.func @transform_4(%arg0: i32) -> (i32, i32, i32) {
    %c0_i32 = arith.constant 0 : i32
    %c0_i32_0 = arith.constant 0 : i32
    %c0_i32_1 = arith.constant 0 : i32
    return %arg0, %c0_i32, %c0_i32_0 : i32, i32, i32
  }
}

</mosaic_0001>

<llo_original>
// kernel: tpu_custom_call.1
$region0: #{tpu_custom_call.1}
  #allocation0 [shape = 'u32[]', space=smem, size = 0x4, offset = 0x4, fixed_abs, tag = 'smem constant byte address 0x4 - core index']
  #allocation1 [shape = 'u32[144,128]{1,0:T(1,128)}', space=vmem, size = 0x12000, scoped, tag = 'internal scratch']
  %s0 = inlined_call_operand.vmem [shape: f32[2,8,2,8,2,4], index: 0, kind: input, shape index: {}]
  %s1 = inlined_call_operand.vmem [shape: bf16[36,8], index: 1, kind: input, shape index: {}]
  %s2 = inlined_call_operand.vmem [shape: f32[1,8], index: 2, kind: input, shape index: {}]
  %s3 = inlined_call_operand.vmem [shape: f32[2,64,8], index: 3, kind: output, shape index: {0}]
  %s4 = inlined_call_operand.hbm [shape: f32[2,2,8], index: 4, kind: output, shape index: {1}]
  %5 = xla_tuple %s3, %s4
  %s6 = sld [smem:[#allocation0]]
  $region53: #{tpu_custom_call.1} parent=0
    _
  %s8 = ssub.s32 1, %s6
  %s9 = scalar_select 0, %s8, %s6
  $region1: #{tpu_custom_call.1} parent=0
    #allocation2 [shape = 'u8[2048]{0}', space=vmem, size = 0x800, scoped, tag = 'output window, operand 1']
    #allocation3 [shape = 's32[2]{0}', space=sflag, size = 0x8, scoped, tag = 'scoped memory for tpu_custom_call.1']
    %10 = vsyncpa [#allocation3], 0
    %s11 = scalar_lea.sflag [#allocation3], 1
    %12 = vsyncpa %s11, 0
    loop: start=0, step=1, limit=4
    $region2: #{tpu_custom_call.1} parent=1 // loop_pre_header
      _
    $region3: #{tpu_custom_call.1} parent=1 // loop_header
      %s14 = sphi 0, %s18
      %p15 = scmp.ge.s32.totalorder %s14, 4
      %s24 = sphi 0, %s26
      %s27 = sphi 0, %s24
      %s28 = sphi 0, %s27
      %s44 = sphi 0, %s28
      %s48 = sphi 0, %s48
      %s50 = sphi 0, %s48
      %s51 = sphi 0, %s50
      %s65 = sphi 0, %s51
      %s69 = sphi 0, %s69
      %s71 = sphi 0, %s69
      %s72 = sphi 0, %s71
      %s86 = sphi 0, %s72
      %s92 = sphi 0, %s94
      %s95 = sphi 0, %s92
      %s96 = sphi 0, %s95
      %s112 = sphi 0, %s96
      %s118 = sphi 0, %s120
      %s121 = sphi 0, %s118
      %s122 = sphi 0, %s121
      %s138 = sphi 0, %s122
    $region4: #{tpu_custom_call.1} parent=1 // loop_header_branch
      %17 = sbr.rel (%p15) target = $region8
    $region5: #{tpu_custom_call.1} parent=1 // loop_body
      %s19 = ssub.s32 %s14, 1
      %s20 = ssub.s32 %s14, 2
      %s21 = sadd.s32 %s14, 1
      %s22 = ssub.s32 %s14, %s21
      %p23 = scmp.eq.s32.totalorder %s22, 0
      %s25 = sadd.s32 %s24, 1
      %s26 = scalar_select %p23, %s24, %s25
      %p29 = pneg %p23
      %p30 = scmp.eq.s32.totalorder %s14, 1
      %p31 = por %p29, %p30
      %p32 = scmp.ne.s32.totalorder %s24, %s27
      %p33 = scmp.eq.s32.totalorder %s14, 0
      %p34 = por %p32, %p33
      %p35 = scmp.ne.s32.totalorder %s24, %s27
      %p36 = scmp.eq.s32.totalorder %s19, 1
      %p37 = por %p35, %p36
      %p38 = scmp.ne.s32.totalorder %s27, %s28
      %p39 = scmp.eq.s32.totalorder %s19, 0
      %p40 = por %p38, %p39
      %p41 = scmp.ne.s32.totalorder %s27, %s28
      %p42 = scmp.eq.s32.totalorder %s20, 1
      %p43 = por %p41, %p42
      %p45 = scmp.ne.s32.totalorder %s28, %s44
      %p46 = scmp.eq.s32.totalorder %s20, 0
      %p47 = por %p45, %p46
      %s49 = sadd.s32 %s48, 1
      %p52 = scmp.eq.s32.totalorder %s14, 1
      %p53 = scmp.ne.s32.totalorder %s48, %s50
      %p54 = scmp.eq.s32.totalorder %s14, 0
      %p55 = por %p53, %p54
      %p56 = scmp.ne.s32.totalorder %s48, %s50
      %p57 = scmp.eq.s32.totalorder %s19, 1
      %p58 = por %p56, %p57
      %p59 = scmp.ne.s32.totalorder %s50, %s51
      %p60 = scmp.eq.s32.totalorder %s19, 0
      %p61 = por %p59, %p60
      %p62 = scmp.ne.s32.totalorder %s50, %s51
      %p63 = scmp.eq.s32.totalorder %s20, 1
      %p64 = por %p62, %p63
      %p66 = scmp.ne.s32.totalorder %s51, %s65
      %p67 = scmp.eq.s32.totalorder %s20, 0
      %p68 = por %p66, %p67
      %s70 = sadd.s32 %s69, 1
      %p73 = scmp.eq.s32.totalorder %s14, 1
      %p74 = scmp.ne.s32.totalorder %s69, %s71
      %p75 = scmp.eq.s32.totalorder %s14, 0
      %p76 = por %p74, %p75
      %p77 = scmp.ne.s32.totalorder %s69, %s71
      %p78 = scmp.eq.s32.totalorder %s19, 1
      %p79 = por %p77, %p78
      %p80 = scmp.ne.s32.totalorder %s71, %s72
      %p81 = scmp.eq.s32.totalorder %s19, 0
      %p82 = por %p80, %p81
      %p83 = scmp.ne.s32.totalorder %s71, %s72
      %p84 = scmp.eq.s32.totalorder %s20, 1
      %p85 = por %p83, %p84
      %p87 = scmp.ne.s32.totalorder %s72, %s86
      %p88 = scmp.eq.s32.totalorder %s20, 0
      %p89 = por %p87, %p88
      %s90 = ssub.s32 %s14, %s21
      %p91 = scmp.eq.s32.totalorder %s90, 0
      %s93 = sadd.s32 %s92, 1
      %s94 = scalar_select %p91, %s92, %s93
      %p97 = pneg %p91
      %p98 = scmp.eq.s32.totalorder %s14, 1
      %p99 = por %p97, %p98
      %p100 = scmp.ne.s32.totalorder %s92, %s95
      %p101 = scmp.eq.s32.totalorder %s14, 0
      %p102 = por %p100, %p101
      %p103 = scmp.ne.s32.totalorder %s92, %s95
      %p104 = scmp.eq.s32.totalorder %s19, 1
      %p105 = por %p103, %p104
      %p106 = scmp.ne.s32.totalorder %s95, %s96
      %p107 = scmp.eq.s32.totalorder %s19, 0
      %p108 = por %p106, %p107
      %p109 = scmp.ne.s32.totalorder %s95, %s96
      %p110 = scmp.eq.s32.totalorder %s20, 1
      %p111 = por %p109, %p110
      %p113 = scmp.ne.s32.totalorder %s96, %s112
      %p114 = scmp.eq.s32.totalorder %s20, 0
      %p115 = por %p113, %p114
      %s116 = ssub.s32 %s14, %s21
      %p117 = scmp.eq.s32.totalorder %s116, 0
      %s119 = sadd.s32 %s118, 1
      %s120 = scalar_select %p117, %s118, %s119
      %p123 = pneg %p117
      %p124 = scmp.eq.s32.totalorder %s14, 1
      %p125 = por %p123, %p124
      %p126 = scmp.ne.s32.totalorder %s118, %s121
      %p127 = scmp.eq.s32.totalorder %s14, 0
      %p128 = por %p126, %p127
      %p129 = scmp.ne.s32.totalorder %s118, %s121
      %p130 = scmp.eq.s32.totalorder %s19, 1
      %p131 = por %p129, %p130
      %p132 = scmp.ne.s32.totalorder %s121, %s122
      %p133 = scmp.eq.s32.totalorder %s19, 0
      %p134 = por %p132, %p133
      %p135 = scmp.ne.s32.totalorder %s121, %s122
      %p136 = scmp.eq.s32.totalorder %s20, 1
      %p137 = por %p135, %p136
      %p139 = scmp.ne.s32.totalorder %s122, %s138
      %p140 = scmp.eq.s32.totalorder %s20, 0
      %p141 = por %p139, %p140
      %p142 = scmp.le.s32.totalorder 1, %s14
      %p143 = scmp.lt.s32.totalorder %s14, 3
      %p144 = pnand %p142, %p143
      %p145 = pneg %p144
      // Predicated region
      $region9: #{tpu_custom_call.1} parent=5 // pred_check
        _
      $region10: #{tpu_custom_call.1} parent=5 // pred_check_branch
        %147 = sbr.rel (%p144) target = $region12
      $region11: #{tpu_custom_call.1} parent=5 // pred_region
        %s148 = ssub.s32 %s14, 1
        // Predicated region
        $region13: #{tpu_custom_call.1} parent=11 // pred_check
          %p149 = pneg %p61
        $region14: #{tpu_custom_call.1} parent=11 // pred_check_branch
          %151 = sbr.rel (%p149) target = $region16
        $region15: #{tpu_custom_call.1} parent=11 // pred_region
          _
        $region16: #{tpu_custom_call.1} parent=11 // pred_fallthru
          _
        // Predicated region
        $region17: #{tpu_custom_call.1} parent=11 // pred_check
          %p152 = pneg %p82
        $region18: #{tpu_custom_call.1} parent=11 // pred_check_branch
          %154 = sbr.rel (%p152) target = $region20
        $region19: #{tpu_custom_call.1} parent=11 // pred_region
          _
        $region20: #{tpu_custom_call.1} parent=11 // pred_fallthru
          _
      $region12: #{tpu_custom_call.1} parent=5 // pred_fallthru
        _
      %p155 = scmp.lt.s32.totalorder %s14, 2
      // Predicated region
      $region21: #{tpu_custom_call.1} parent=5 // pred_check
        %p156 = pneg %p155
      $region22: #{tpu_custom_call.1} parent=5 // pred_check_branch
        %158 = sbr.rel (%p156) target = $region24
      $region23: #{tpu_custom_call.1} parent=5 // pred_region
        // Predicated region
        $region25: #{tpu_custom_call.1} parent=23 // pred_check
          %p159 = pneg %p34
        $region26: #{tpu_custom_call.1} parent=23 // pred_check_branch
          %161 = sbr.rel (%p159) target = $region28
        $region27: #{tpu_custom_call.1} parent=23 // pred_region
          %p162 = scmp.lt.s32.totalorder %s14, 1
          %s163 = scalar_select %p162, %s14, 1
          %s164 = smul.addr %s163, 128
          %s165 = smul.addr %s164, 2
          %s166 = scalar_lea.vmem %s0, %s165
        $region28: #{tpu_custom_call.1} parent=23 // pred_fallthru
          _
      $region24: #{tpu_custom_call.1} parent=5 // pred_fallthru
        _
      %p167 = scmp.le.s32.totalorder 1, %s14
      %p168 = scmp.lt.s32.totalorder %s14, 3
      %p169 = pnand %p167, %p168
      %p170 = pneg %p169
      // Predicated region
      $region29: #{tpu_custom_call.1} parent=5 // pred_check
        _
      $region30: #{tpu_custom_call.1} parent=5 // pred_check_branch
        %172 = sbr.rel (%p169) target = $region32
      $region31: #{tpu_custom_call.1} parent=5 // pred_region
        %s173 = ssub.s32 %s14, 1
        %p174 = scmp.lt.s32.totalorder %s19, 1
        %s175 = scalar_select %p174, %s19, 1
        %s176 = smul.addr %s175, 128
        %s177 = smul.addr %s176, 2
        %s178 = scalar_lea.vmem %s0, %s177
        %p179 = pneg %p40
        %p180 = pneg %p37
        %p181 = pneg %p61
        %p182 = pneg %p58
        %p183 = pneg %p82
        %p184 = pneg %p79
        %p185 = pneg %p108
        %p186 = pneg %p105
        %p187 = scmp.lt.s32.totalorder %s19, 1
        %s188 = scalar_select %p187, %s19, 1
        %s189 = smul.addr %s188, 8
        %s190 = smul.addr %s189, 8
        %s191 = scalar_lea.vmem %s3, %s190
        %p192 = pneg %p134
        %p193 = pneg %p131
        %s194 = sand.u32 %s121, 1
        %s195 = scalar_lea.sflag [#allocation3], %s194
        %s196 = sand.u32 %s121, 1
        %s197 = smul.addr %s196, 2
        %s198 = scalar_lea.vmem [#allocation2], %s197
        %p199 = scmp.lt.s32.totalorder %s19, 1
        %s200 = scalar_select %p199, %s19, 1
        %s201 = smul.addr %s200, 128
        %s202 = smul.addr %s201, 2
        %s203 = scalar_lea.vmem %s0, %s202
        %p204 = scmp.lt.s32.totalorder %s19, 1
        %s205 = scalar_select %p204, %s19, 1
        %s206 = smul.addr %s205, 8
        %s207 = smul.addr %s206, 8
        %s208 = scalar_lea.vmem %s3, %s207
        %v210 = vld [vmem:[%s203] sm:$0x3]
        %v211 = vld [vmem:[%s203 + $0x2] sm:$0x3]
        %v212 = vld [vmem:[%s203 + $0x4] sm:$0x3]
        %v213 = vld [vmem:[%s203 + $0x6] sm:$0x3]
        %v214 = vld [vmem:[%s203 + $0x8] sm:$0x3]
        %v215 = vld [vmem:[%s203 + $0xa] sm:$0x3]
        %v216 = vld [vmem:[%s203 + $0xc] sm:$0x3]
        %v217 = vld [vmem:[%s203 + $0xe] sm:$0x3]
        %v218 = vld [vmem:[%s203 + $0x10] sm:$0x3]
        %v219 = vld [vmem:[%s203 + $0x12] sm:$0x3]
        %v220 = vld [vmem:[%s203 + $0x14] sm:$0x3]
        %v221 = vld [vmem:[%s203 + $0x16] sm:$0x3]
        %v222 = vld [vmem:[%s203 + $0x18] sm:$0x3]
        %v223 = vld [vmem:[%s203 + $0x1a] sm:$0x3]
        %v224 = vld [vmem:[%s203 + $0x1c] sm:$0x3]
        %v225 = vld [vmem:[%s203 + $0x1e] sm:$0x3]
        %v226 = vld [vmem:[%s203 + $0x20] sm:$0x3]
        %v227 = vld [vmem:[%s203 + $0x22] sm:$0x3]
        %v228 = vld [vmem:[%s203 + $0x24] sm:$0x3]
        %v229 = vld [vmem:[%s203 + $0x26] sm:$0x3]
        %v230 = vld [vmem:[%s203 + $0x28] sm:$0x3]
        %v231 = vld [vmem:[%s203 + $0x2a] sm:$0x3]
        %v232 = vld [vmem:[%s203 + $0x2c] sm:$0x3]
        %v233 = vld [vmem:[%s203 + $0x2e] sm:$0x3]
        %v234 = vld [vmem:[%s203 + $0x30] sm:$0x3]
        %v235 = vld [vmem:[%s203 + $0x32] sm:$0x3]
        %v236 = vld [vmem:[%s203 + $0x34] sm:$0x3]
        %v237 = vld [vmem:[%s203 + $0x36] sm:$0x3]
        %v238 = vld [vmem:[%s203 + $0x38] sm:$0x3]
        %v239 = vld [vmem:[%s203 + $0x3a] sm:$0x3]
        %v240 = vld [vmem:[%s203 + $0x3c] sm:$0x3]
        %v241 = vld [vmem:[%s203 + $0x3e] sm:$0x3]
        %v242 = vld [vmem:[%s203 + $0x40] sm:$0x3]
        %v243 = vld [vmem:[%s203 + $0x42] sm:$0x3]
        %v244 = vld [vmem:[%s203 + $0x44] sm:$0x3]
        %v245 = vld [vmem:[%s203 + $0x46] sm:$0x3]
        %v246 = vld [vmem:[%s203 + $0x48] sm:$0x3]
        %v247 = vld [vmem:[%s203 + $0x4a] sm:$0x3]
        %v248 = vld [vmem:[%s203 + $0x4c] sm:$0x3]
        %v249 = vld [vmem:[%s203 + $0x4e] sm:$0x3]
        %v250 = vld [vmem:[%s203 + $0x50] sm:$0x3]
        %v251 = vld [vmem:[%s203 + $0x52] sm:$0x3]
        %v252 = vld [vmem:[%s203 + $0x54] sm:$0x3]
        %v253 = vld [vmem:[%s203 + $0x56] sm:$0x3]
        %v254 = vld [vmem:[%s203 + $0x58] sm:$0x3]
        %v255 = vld [vmem:[%s203 + $0x5a] sm:$0x3]
        %v256 = vld [vmem:[%s203 + $0x5c] sm:$0x3]
        %v257 = vld [vmem:[%s203 + $0x5e] sm:$0x3]
        %v258 = vld [vmem:[%s203 + $0x60] sm:$0x3]
        %v259 = vld [vmem:[%s203 + $0x62] sm:$0x3]
        %v260 = vld [vmem:[%s203 + $0x64] sm:$0x3]
        %v261 = vld [vmem:[%s203 + $0x66] sm:$0x3]
        %v262 = vld [vmem:[%s203 + $0x68] sm:$0x3]
        %v263 = vld [vmem:[%s203 + $0x6a] sm:$0x3]
        %v264 = vld [vmem:[%s203 + $0x6c] sm:$0x3]
        %v265 = vld [vmem:[%s203 + $0x6e] sm:$0x3]
        %v266 = vld [vmem:[%s203 + $0x70] sm:$0x3]
        %v267 = vld [vmem:[%s203 + $0x72] sm:$0x3]
        %v268 = vld [vmem:[%s203 + $0x74] sm:$0x3]
        %v269 = vld [vmem:[%s203 + $0x76] sm:$0x3]
        %v270 = vld [vmem:[%s203 + $0x78] sm:$0x3]
        %v271 = vld [vmem:[%s203 + $0x7a] sm:$0x3]
        %v272 = vld [vmem:[%s203 + $0x7c] sm:$0x3]
        %v273 = vld [vmem:[%s203 + $0x7e] sm:$0x3]
        %v274 = vld [vmem:[%s203 + $0x80] sm:$0x3]
        %v275 = vld [vmem:[%s203 + $0x82] sm:$0x3]
        %v276 = vld [vmem:[%s203 + $0x84] sm:$0x3]
        %v277 = vld [vmem:[%s203 + $0x86] sm:$0x3]
        %v278 = vld [vmem:[%s203 + $0x88] sm:$0x3]
        %v279 = vld [vmem:[%s203 + $0x8a] sm:$0x3]
        %v280 = vld [vmem:[%s203 + $0x8c] sm:$0x3]
        %v281 = vld [vmem:[%s203 + $0x8e] sm:$0x3]
        %v282 = vld [vmem:[%s203 + $0x90] sm:$0x3]
        %v283 = vld [vmem:[%s203 + $0x92] sm:$0x3]
        %v284 = vld [vmem:[%s203 + $0x94] sm:$0x3]
        %v285 = vld [vmem:[%s203 + $0x96] sm:$0x3]
        %v286 = vld [vmem:[%s203 + $0x98] sm:$0x3]
        %v287 = vld [vmem:[%s203 + $0x9a] sm:$0x3]
        %v288 = vld [vmem:[%s203 + $0x9c] sm:$0x3]
        %v289 = vld [vmem:[%s203 + $0x9e] sm:$0x3]
        %v290 = vld [vmem:[%s203 + $0xa0] sm:$0x3]
        %v291 = vld [vmem:[%s203 + $0xa2] sm:$0x3]
        %v292 = vld [vmem:[%s203 + $0xa4] sm:$0x3]
        %v293 = vld [vmem:[%s203 + $0xa6] sm:$0x3]
        %v294 = vld [vmem:[%s203 + $0xa8] sm:$0x3]
        %v295 = vld [vmem:[%s203 + $0xaa] sm:$0x3]
        %v296 = vld [vmem:[%s203 + $0xac] sm:$0x3]
        %v297 = vld [vmem:[%s203 + $0xae] sm:$0x3]
        %v298 = vld [vmem:[%s203 + $0xb0] sm:$0x3]
        %v299 = vld [vmem:[%s203 + $0xb2] sm:$0x3]
        %v300 = vld [vmem:[%s203 + $0xb4] sm:$0x3]
        %v301 = vld [vmem:[%s203 + $0xb6] sm:$0x3]
        %v302 = vld [vmem:[%s203 + $0xb8] sm:$0x3]
        %v303 = vld [vmem:[%s203 + $0xba] sm:$0x3]
        %v304 = vld [vmem:[%s203 + $0xbc] sm:$0x3]
        %v305 = vld [vmem:[%s203 + $0xbe] sm:$0x3]
        %v306 = vld [vmem:[%s203 + $0xc0] sm:$0x3]
        %v307 = vld [vmem:[%s203 + $0xc2] sm:$0x3]
        %v308 = vld [vmem:[%s203 + $0xc4] sm:$0x3]
        %v309 = vld [vmem:[%s203 + $0xc6] sm:$0x3]
        %v310 = vld [vmem:[%s203 + $0xc8] sm:$0x3]
        %v311 = vld [vmem:[%s203 + $0xca] sm:$0x3]
        %v312 = vld [vmem:[%s203 + $0xcc] sm:$0x3]
        %v313 = vld [vmem:[%s203 + $0xce] sm:$0x3]
        %v314 = vld [vmem:[%s203 + $0xd0] sm:$0x3]
        %v315 = vld [vmem:[%s203 + $0xd2] sm:$0x3]
        %v316 = vld [vmem:[%s203 + $0xd4] sm:$0x3]
        %v317 = vld [vmem:[%s203 + $0xd6] sm:$0x3]
        %v318 = vld [vmem:[%s203 + $0xd8] sm:$0x3]
        %v319 = vld [vmem:[%s203 + $0xda] sm:$0x3]
        %v320 = vld [vmem:[%s203 + $0xdc] sm:$0x3]
        %v321 = vld [vmem:[%s203 + $0xde] sm:$0x3]
        %v322 = vld [vmem:[%s203 + $0xe0] sm:$0x3]
        %v323 = vld [vmem:[%s203 + $0xe2] sm:$0x3]
        %v324 = vld [vmem:[%s203 + $0xe4] sm:$0x3]
        %v325 = vld [vmem:[%s203 + $0xe6] sm:$0x3]
        %v326 = vld [vmem:[%s203 + $0xe8] sm:$0x3]
        %v327 = vld [vmem:[%s203 + $0xea] sm:$0x3]
        %v328 = vld [vmem:[%s203 + $0xec] sm:$0x3]
        %v329 = vld [vmem:[%s203 + $0xee] sm:$0x3]
        %v330 = vld [vmem:[%s203 + $0xf0] sm:$0x3]
        %v331 = vld [vmem:[%s203 + $0xf2] sm:$0x3]
        %v332 = vld [vmem:[%s203 + $0xf4] sm:$0x3]
        %v333 = vld [vmem:[%s203 + $0xf6] sm:$0x3]
        %v334 = vld [vmem:[%s203 + $0xf8] sm:$0x3]
        %v335 = vld [vmem:[%s203 + $0xfa] sm:$0x3]
        %v336 = vld [vmem:[%s203 + $0xfc] sm:$0x3]
        %v337 = vld [vmem:[%s203 + $0xfe] sm:$0x3]
        %v402 = vrot.slane %v210, 1
        %v403 = vrot.slane %v211, 1
        %v404 = vrot.slane %v212, 1
        %v405 = vrot.slane %v213, 1
        %v406 = vrot.slane %v214, 1
        %v407 = vrot.slane %v215, 1
        %v408 = vrot.slane %v216, 1
        %v409 = vrot.slane %v217, 1
        %v410 = vrot.slane %v226, 1
        %v411 = vrot.slane %v227, 1
        %v412 = vrot.slane %v228, 1
        %v413 = vrot.slane %v229, 1
        %v414 = vrot.slane %v230, 1
        %v415 = vrot.slane %v231, 1
        %v416 = vrot.slane %v232, 1
        %v417 = vrot.slane %v233, 1
        %v418 = vrot.slane %v242, 1
        %v419 = vrot.slane %v243, 1
        %v420 = vrot.slane %v244, 1
        %v421 = vrot.slane %v245, 1
        %v422 = vrot.slane %v246, 1
        %v423 = vrot.slane %v247, 1
        %v424 = vrot.slane %v248, 1
        %v425 = vrot.slane %v249, 1
        %v426 = vrot.slane %v258, 1
        %v427 = vrot.slane %v259, 1
        %v428 = vrot.slane %v260, 1
        %v429 = vrot.slane %v261, 1
        %v430 = vrot.slane %v262, 1
        %v431 = vrot.slane %v263, 1
        %v432 = vrot.slane %v264, 1
        %v433 = vrot.slane %v265, 1
        %v434 = vrot.slane %v274, 1
        %v435 = vrot.slane %v275, 1
        %v436 = vrot.slane %v276, 1
        %v437 = vrot.slane %v277, 1
        %v438 = vrot.slane %v278, 1
        %v439 = vrot.slane %v279, 1
        %v440 = vrot.slane %v280, 1
        %v441 = vrot.slane %v281, 1
        %v442 = vrot.slane %v290, 1
        %v443 = vrot.slane %v291, 1
        %v444 = vrot.slane %v292, 1
        %v445 = vrot.slane %v293, 1
        %v446 = vrot.slane %v294, 1
        %v447 = vrot.slane %v295, 1
        %v448 = vrot.slane %v296, 1
        %v449 = vrot.slane %v297, 1
        %v450 = vrot.slane %v306, 1
        %v451 = vrot.slane %v307, 1
        %v452 = vrot.slane %v308, 1
        %v453 = vrot.slane %v309, 1
        %v454 = vrot.slane %v310, 1
        %v455 = vrot.slane %v311, 1
        %v456 = vrot.slane %v312, 1
        %v457 = vrot.slane %v313, 1
        %v458 = vrot.slane %v322, 1
        %v459 = vrot.slane %v323, 1
        %v460 = vrot.slane %v324, 1
        %v461 = vrot.slane %v325, 1
        %v462 = vrot.slane %v326, 1
        %v463 = vrot.slane %v327, 1
        %v464 = vrot.slane %v328, 1
        %v465 = vrot.slane %v329, 1
        %v530 = vmax.f32 %v210, %v402
        %v531 = vmax.f32 %v211, %v403
        %v532 = vmax.f32 %v212, %v404
        %v533 = vmax.f32 %v213, %v405
        %v534 = vmax.f32 %v214, %v406
        %v535 = vmax.f32 %v215, %v407
        %v536 = vmax.f32 %v216, %v408
        %v537 = vmax.f32 %v217, %v409
        %v538 = vmax.f32 %v226, %v410
        %v539 = vmax.f32 %v227, %v411
        %v540 = vmax.f32 %v228, %v412
        %v541 = vmax.f32 %v229, %v413
        %v542 = vmax.f32 %v230, %v414
        %v543 = vmax.f32 %v231, %v415
        %v544 = vmax.f32 %v232, %v416
        %v545 = vmax.f32 %v233, %v417
        %v546 = vmax.f32 %v242, %v418
        %v547 = vmax.f32 %v243, %v419
        %v548 = vmax.f32 %v244, %v420
        %v549 = vmax.f32 %v245, %v421
        %v550 = vmax.f32 %v246, %v422
        %v551 = vmax.f32 %v247, %v423
        %v552 = vmax.f32 %v248, %v424
        %v553 = vmax.f32 %v249, %v425
        %v554 = vmax.f32 %v258, %v426
        %v555 = vmax.f32 %v259, %v427
        %v556 = vmax.f32 %v260, %v428
        %v557 = vmax.f32 %v261, %v429
        %v558 = vmax.f32 %v262, %v430
        %v559 = vmax.f32 %v263, %v431
        %v560 = vmax.f32 %v264, %v432
        %v561 = vmax.f32 %v265, %v433
        %v562 = vmax.f32 %v274, %v434
        %v563 = vmax.f32 %v275, %v435
        %v564 = vmax.f32 %v276, %v436
        %v565 = vmax.f32 %v277, %v437
        %v566 = vmax.f32 %v278, %v438
        %v567 = vmax.f32 %v279, %v439
        %v568 = vmax.f32 %v280, %v440
        %v569 = vmax.f32 %v281, %v441
        %v570 = vmax.f32 %v290, %v442
        %v571 = vmax.f32 %v291, %v443
        %v572 = vmax.f32 %v292, %v444
        %v573 = vmax.f32 %v293, %v445
        %v574 = vmax.f32 %v294, %v446
        %v575 = vmax.f32 %v295, %v447
        %v576 = vmax.f32 %v296, %v448
        %v577 = vmax.f32 %v297, %v449
        %v578 = vmax.f32 %v306, %v450
        %v579 = vmax.f32 %v307, %v451
        %v580 = vmax.f32 %v308, %v452
        %v581 = vmax.f32 %v309, %v453
        %v582 = vmax.f32 %v310, %v454
        %v583 = vmax.f32 %v311, %v455
        %v584 = vmax.f32 %v312, %v456
        %v585 = vmax.f32 %v313, %v457
        %v586 = vmax.f32 %v322, %v458
        %v587 = vmax.f32 %v323, %v459
        %v588 = vmax.f32 %v324, %v460
        %v589 = vmax.f32 %v325, %v461
        %v590 = vmax.f32 %v326, %v462
        %v591 = vmax.f32 %v327, %v463
        %v592 = vmax.f32 %v328, %v464
        %v593 = vmax.f32 %v329, %v465
        %v658 = vrot.slane %v218, 1
        %v659 = vrot.slane %v219, 1
        %v660 = vrot.slane %v220, 1
        %v661 = vrot.slane %v221, 1
        %v662 = vrot.slane %v222, 1
        %v663 = vrot.slane %v223, 1
        %v664 = vrot.slane %v224, 1
        %v665 = vrot.slane %v225, 1
        %v666 = vrot.slane %v234, 1
        %v667 = vrot.slane %v235, 1
        %v668 = vrot.slane %v236, 1
        %v669 = vrot.slane %v237, 1
        %v670 = vrot.slane %v238, 1
        %v671 = vrot.slane %v239, 1
        %v672 = vrot.slane %v240, 1
        %v673 = vrot.slane %v241, 1
        %v674 = vrot.slane %v250, 1
        %v675 = vrot.slane %v251, 1
        %v676 = vrot.slane %v252, 1
        %v677 = vrot.slane %v253, 1
        %v678 = vrot.slane %v254, 1
        %v679 = vrot.slane %v255, 1
        %v680 = vrot.slane %v256, 1
        %v681 = vrot.slane %v257, 1
        %v682 = vrot.slane %v266, 1
        %v683 = vrot.slane %v267, 1
        %v684 = vrot.slane %v268, 1
        %v685 = vrot.slane %v269, 1
        %v686 = vrot.slane %v270, 1
        %v687 = vrot.slane %v271, 1
        %v688 = vrot.slane %v272, 1
        %v689 = vrot.slane %v273, 1
        %v690 = vrot.slane %v282, 1
        %v691 = vrot.slane %v283, 1
        %v692 = vrot.slane %v284, 1
        %v693 = vrot.slane %v285, 1
        %v694 = vrot.slane %v286, 1
        %v695 = vrot.slane %v287, 1
        %v696 = vrot.slane %v288, 1
        %v697 = vrot.slane %v289, 1
        %v698 = vrot.slane %v298, 1
        %v699 = vrot.slane %v299, 1
        %v700 = vrot.slane %v300, 1
        %v701 = vrot.slane %v301, 1
        %v702 = vrot.slane %v302, 1
        %v703 = vrot.slane %v303, 1
        %v704 = vrot.slane %v304, 1
        %v705 = vrot.slane %v305, 1
        %v706 = vrot.slane %v314, 1
        %v707 = vrot.slane %v315, 1
        %v708 = vrot.slane %v316, 1
        %v709 = vrot.slane %v317, 1
        %v710 = vrot.slane %v318, 1
        %v711 = vrot.slane %v319, 1
        %v712 = vrot.slane %v320, 1
        %v713 = vrot.slane %v321, 1
        %v714 = vrot.slane %v330, 1
        %v715 = vrot.slane %v331, 1
        %v716 = vrot.slane %v332, 1
        %v717 = vrot.slane %v333, 1
        %v718 = vrot.slane %v334, 1
        %v719 = vrot.slane %v335, 1
        %v720 = vrot.slane %v336, 1
        %v721 = vrot.slane %v337, 1
        %v786 = vmax.f32 %v218, %v658
        %v787 = vmax.f32 %v219, %v659
        %v788 = vmax.f32 %v220, %v660
        %v789 = vmax.f32 %v221, %v661
        %v790 = vmax.f32 %v222, %v662
        %v791 = vmax.f32 %v223, %v663
        %v792 = vmax.f32 %v224, %v664
        %v793 = vmax.f32 %v225, %v665
        %v794 = vmax.f32 %v234, %v666
        %v795 = vmax.f32 %v235, %v667
        %v796 = vmax.f32 %v236, %v668
        %v797 = vmax.f32 %v237, %v669
        %v798 = vmax.f32 %v238, %v670
        %v799 = vmax.f32 %v239, %v671
        %v800 = vmax.f32 %v240, %v672
        %v801 = vmax.f32 %v241, %v673
        %v802 = vmax.f32 %v250, %v674
        %v803 = vmax.f32 %v251, %v675
        %v804 = vmax.f32 %v252, %v676
        %v805 = vmax.f32 %v253, %v677
        %v806 = vmax.f32 %v254, %v678
        %v807 = vmax.f32 %v255, %v679
        %v808 = vmax.f32 %v256, %v680
        %v809 = vmax.f32 %v257, %v681
        %v810 = vmax.f32 %v266, %v682
        %v811 = vmax.f32 %v267, %v683
        %v812 = vmax.f32 %v268, %v684
        %v813 = vmax.f32 %v269, %v685
        %v814 = vmax.f32 %v270, %v686
        %v815 = vmax.f32 %v271, %v687
        %v816 = vmax.f32 %v272, %v688
        %v817 = vmax.f32 %v273, %v689
        %v818 = vmax.f32 %v282, %v690
        %v819 = vmax.f32 %v283, %v691
        %v820 = vmax.f32 %v284, %v692
        %v821 = vmax.f32 %v285, %v693
        %v822 = vmax.f32 %v286, %v694
        %v823 = vmax.f32 %v287, %v695
        %v824 = vmax.f32 %v288, %v696
        %v825 = vmax.f32 %v289, %v697
        %v826 = vmax.f32 %v298, %v698
        %v827 = vmax.f32 %v299, %v699
        %v828 = vmax.f32 %v300, %v700
        %v829 = vmax.f32 %v301, %v701
        %v830 = vmax.f32 %v302, %v702
        %v831 = vmax.f32 %v303, %v703
        %v832 = vmax.f32 %v304, %v704
        %v833 = vmax.f32 %v305, %v705
        %v834 = vmax.f32 %v314, %v706
        %v835 = vmax.f32 %v315, %v707
        %v836 = vmax.f32 %v316, %v708
        %v837 = vmax.f32 %v317, %v709
        %v838 = vmax.f32 %v318, %v710
        %v839 = vmax.f32 %v319, %v711
        %v840 = vmax.f32 %v320, %v712
        %v841 = vmax.f32 %v321, %v713
        %v842 = vmax.f32 %v330, %v714
        %v843 = vmax.f32 %v331, %v715
        %v844 = vmax.f32 %v332, %v716
        %v845 = vmax.f32 %v333, %v717
        %v846 = vmax.f32 %v334, %v718
        %v847 = vmax.f32 %v335, %v719
        %v848 = vmax.f32 %v336, %v720
        %v849 = vmax.f32 %v337, %v721
        %v850 = vmax.f32 %v530, %v786
        %v851 = vmax.f32 %v531, %v787
        %v852 = vmax.f32 %v532, %v788
        %v853 = vmax.f32 %v533, %v789
        %v854 = vmax.f32 %v534, %v790
        %v855 = vmax.f32 %v535, %v791
        %v856 = vmax.f32 %v536, %v792
        %v857 = vmax.f32 %v537, %v793
        %v858 = vmax.f32 %v538, %v794
        %v859 = vmax.f32 %v539, %v795
        %v860 = vmax.f32 %v540, %v796
        %v861 = vmax.f32 %v541, %v797
        %v862 = vmax.f32 %v542, %v798
        %v863 = vmax.f32 %v543, %v799
        %v864 = vmax.f32 %v544, %v800
        %v865 = vmax.f32 %v545, %v801
        %v866 = vmax.f32 %v546, %v802
        %v867 = vmax.f32 %v547, %v803
        %v868 = vmax.f32 %v548, %v804
        %v869 = vmax.f32 %v549, %v805
        %v870 = vmax.f32 %v550, %v806
        %v871 = vmax.f32 %v551, %v807
        %v872 = vmax.f32 %v552, %v808
        %v873 = vmax.f32 %v553, %v809
        %v874 = vmax.f32 %v554, %v810
        %v875 = vmax.f32 %v555, %v811
        %v876 = vmax.f32 %v556, %v812
        %v877 = vmax.f32 %v557, %v813
        %v878 = vmax.f32 %v558, %v814
        %v879 = vmax.f32 %v559, %v815
        %v880 = vmax.f32 %v560, %v816
        %v881 = vmax.f32 %v561, %v817
        %v882 = vmax.f32 %v562, %v818
        %v883 = vmax.f32 %v563, %v819
        %v884 = vmax.f32 %v564, %v820
        %v885 = vmax.f32 %v565, %v821
        %v886 = vmax.f32 %v566, %v822
        %v887 = vmax.f32 %v567, %v823
        %v888 = vmax.f32 %v568, %v824
        %v889 = vmax.f32 %v569, %v825
        %v890 = vmax.f32 %v570, %v826
        %v891 = vmax.f32 %v571, %v827
        %v892 = vmax.f32 %v572, %v828
        %v893 = vmax.f32 %v573, %v829
        %v894 = vmax.f32 %v574, %v830
        %v895 = vmax.f32 %v575, %v831
        %v896 = vmax.f32 %v576, %v832
        %v897 = vmax.f32 %v577, %v833
        %v898 = vmax.f32 %v578, %v834
        %v899 = vmax.f32 %v579, %v835
        %v900 = vmax.f32 %v580, %v836
        %v901 = vmax.f32 %v581, %v837
        %v902 = vmax.f32 %v582, %v838
        %v903 = vmax.f32 %v583, %v839
        %v904 = vmax.f32 %v584, %v840
        %v905 = vmax.f32 %v585, %v841
        %v906 = vmax.f32 %v586, %v842
        %v907 = vmax.f32 %v587, %v843
        %v908 = vmax.f32 %v588, %v844
        %v909 = vmax.f32 %v589, %v845
        %v910 = vmax.f32 %v590, %v846
        %v911 = vmax.f32 %v591, %v847
        %v912 = vmax.f32 %v592, %v848
        %v913 = vmax.f32 %v593, %v849
        %v978 = vrot.slane %v851, 7
        %vm979 = vcmask 1041409
        %v980 = vsel %vm979, %v978, %v850
        %v981 = vrot.slane %v852, 6
        %vm982 = vcmask 1042434
        %v983 = vsel %vm982, %v981, %v980
        %v984 = vrot.slane %v853, 5
        %vm985 = vcmask 1043459
        %v986 = vsel %vm985, %v984, %v983
        %v987 = vrot.slane %v854, 4
        %vm988 = vcmask 1044484
        %v989 = vsel %vm988, %v987, %v986
        %v990 = vrot.slane %v855, 3
        %vm991 = vcmask 1045509
        %v992 = vsel %vm991, %v990, %v989
        %v993 = vrot.slane %v856, 2
        %vm994 = vcmask 1046534
        %v995 = vsel %vm994, %v993, %v992
        %v996 = vrot.slane %v857, 1
        %vm997 = vcmask 1047559
        %v998 = vsel %vm997, %v996, %v995
        %v999 = vrot.slane %v859, 7
        %v1000 = vsel %vm979, %v999, %v858
        %v1001 = vrot.slane %v860, 6
        %v1002 = vsel %vm982, %v1001, %v1000
        %v1003 = vrot.slane %v861, 5
        %v1004 = vsel %vm985, %v1003, %v1002
        %v1005 = vrot.slane %v862, 4
        %v1006 = vsel %vm988, %v1005, %v1004
        %v1007 = vrot.slane %v863, 3
        %v1008 = vsel %vm991, %v1007, %v1006
        %v1009 = vrot.slane %v864, 2
        %v1010 = vsel %vm994, %v1009, %v1008
        %v1011 = vrot.slane %v865, 1
        %v1012 = vsel %vm997, %v1011, %v1010
        %v1013 = vrot.slane %v867, 7
        %v1014 = vsel %vm979, %v1013, %v866
        %v1015 = vrot.slane %v868, 6
        %v1016 = vsel %vm982, %v1015, %v1014
        %v1017 = vrot.slane %v869, 5
        %v1018 = vsel %vm985, %v1017, %v1016
        %v1019 = vrot.slane %v870, 4
        %v1020 = vsel %vm988, %v1019, %v1018
        %v1021 = vrot.slane %v871, 3
        %v1022 = vsel %vm991, %v1021, %v1020
        %v1023 = vrot.slane %v872, 2
        %v1024 = vsel %vm994, %v1023, %v1022
        %v1025 = vrot.slane %v873, 1
        %v1026 = vsel %vm997, %v1025, %v1024
        %v1027 = vrot.slane %v875, 7
        %v1028 = vsel %vm979, %v1027, %v874
        %v1029 = vrot.slane %v876, 6
        %v1030 = vsel %vm982, %v1029, %v1028
        %v1031 = vrot.slane %v877, 5
        %v1032 = vsel %vm985, %v1031, %v1030
        %v1033 = vrot.slane %v878, 4
        %v1034 = vsel %vm988, %v1033, %v1032
        %v1035 = vrot.slane %v879, 3
        %v1036 = vsel %vm991, %v1035, %v1034
        %v1037 = vrot.slane %v880, 2
        %v1038 = vsel %vm994, %v1037, %v1036
        %v1039 = vrot.slane %v881, 1
        %v1040 = vsel %vm997, %v1039, %v1038
        %v1041 = vrot.slane %v883, 7
        %v1042 = vsel %vm979, %v1041, %v882
        %v1043 = vrot.slane %v884, 6
        %v1044 = vsel %vm982, %v1043, %v1042
        %v1045 = vrot.slane %v885, 5
        %v1046 = vsel %vm985, %v1045, %v1044
        %v1047 = vrot.slane %v886, 4
        %v1048 = vsel %vm988, %v1047, %v1046
        %v1049 = vrot.slane %v887, 3
        %v1050 = vsel %vm991, %v1049, %v1048
        %v1051 = vrot.slane %v888, 2
        %v1052 = vsel %vm994, %v1051, %v1050
        %v1053 = vrot.slane %v889, 1
        %v1054 = vsel %vm997, %v1053, %v1052
        %v1055 = vrot.slane %v891, 7
        %v1056 = vsel %vm979, %v1055, %v890
        %v1057 = vrot.slane %v892, 6
        %v1058 = vsel %vm982, %v1057, %v1056
        %v1059 = vrot.slane %v893, 5
        %v1060 = vsel %vm985, %v1059, %v1058
        %v1061 = vrot.slane %v894, 4
        %v1062 = vsel %vm988, %v1061, %v1060
        %v1063 = vrot.slane %v895, 3
        %v1064 = vsel %vm991, %v1063, %v1062
        %v1065 = vrot.slane %v896, 2
        %v1066 = vsel %vm994, %v1065, %v1064
        %v1067 = vrot.slane %v897, 1
        %v1068 = vsel %vm997, %v1067, %v1066
        %v1069 = vrot.slane %v899, 7
        %v1070 = vsel %vm979, %v1069, %v898
        %v1071 = vrot.slane %v900, 6
        %v1072 = vsel %vm982, %v1071, %v1070
        %v1073 = vrot.slane %v901, 5
        %v1074 = vsel %vm985, %v1073, %v1072
        %v1075 = vrot.slane %v902, 4
        %v1076 = vsel %vm988, %v1075, %v1074
        %v1077 = vrot.slane %v903, 3
        %v1078 = vsel %vm991, %v1077, %v1076
        %v1079 = vrot.slane %v904, 2
        %v1080 = vsel %vm994, %v1079, %v1078
        %v1081 = vrot.slane %v905, 1
        %v1082 = vsel %vm997, %v1081, %v1080
        %v1083 = vrot.slane %v907, 7
        %v1084 = vsel %vm979, %v1083, %v906
        %v1085 = vrot.slane %v908, 6
        %v1086 = vsel %vm982, %v1085, %v1084
        %v1087 = vrot.slane %v909, 5
        %v1088 = vsel %vm985, %v1087, %v1086
        %v1089 = vrot.slane %v910, 4
        %v1090 = vsel %vm988, %v1089, %v1088
        %v1091 = vrot.slane %v911, 3
        %v1092 = vsel %vm991, %v1091, %v1090
        %v1093 = vrot.slane %v912, 2
        %v1094 = vsel %vm994, %v1093, %v1092
        %v1095 = vrot.slane %v913, 1
        %v1096 = vsel %vm997, %v1095, %v1094
        %v1098 = vrot.slane 0.0, 7
        %v1099 = vrot.slane %v998, 7
        %v1100 = vrot.slane %v1012, 7
        %v1101 = vrot.slane %v1026, 7
        %v1102 = vrot.slane %v1040, 7
        %v1103 = vrot.slane %v1054, 7
        %v1104 = vrot.slane %v1068, 7
        %v1105 = vrot.slane %v1082, 7
        %v1106 = vrot.slane %v1096, 7
        %vm1116 = vcmask 1040384
        %v1117 = vsel %vm1116, 0.0, %v1098
        %v1118 = vsel %vm1116, 0.0, %v1099
        %v1119 = vsel %vm1116, 0.0, %v1100
        %v1120 = vsel %vm1116, 0.0, %v1101
        %v1121 = vsel %vm1116, 0.0, %v1102
        %v1122 = vsel %vm1116, 0.0, %v1103
        %v1123 = vsel %vm1116, 0.0, %v1104
        %v1124 = vsel %vm1116, 0.0, %v1105
        %v1125 = vsel %vm1116, 0.0, %v1106
        %v1126 = vsel %vm1116, %v1098, 0.0
        %v1127 = vsel %vm1116, %v1099, 0.0
        %v1128 = vsel %vm1116, %v1100, 0.0
        %v1129 = vsel %vm1116, %v1101, 0.0
        %v1130 = vsel %vm1116, %v1102, 0.0
        %v1131 = vsel %vm1116, %v1103, 0.0
        %v1132 = vsel %vm1116, %v1104, 0.0
        %v1133 = vsel %vm1116, %v1105, 0.0
        %v1134 = vsel %vm1116, %v1106, 0.0
        %vm1151 = vcmask 1046528
        %v1152 = vrot.slane %v1117, 1
        %v1153 = vrot.slane %v1126, 1
        %v1154 = vsel %vm1151, %v1152, %v1153
        %v1155 = vrot.slane %v1118, 1
        %v1156 = vrot.slane %v1127, 1
        %v1157 = vsel %vm1151, %v1155, %v1156
        %v1158 = vrot.slane %v1119, 1
        %v1159 = vrot.slane %v1128, 1
        %v1160 = vsel %vm1151, %v1158, %v1159
        %v1161 = vrot.slane %v1120, 1
        %v1162 = vrot.slane %v1129, 1
        %v1163 = vsel %vm1151, %v1161, %v1162
        %v1164 = vrot.slane %v1121, 1
        %v1165 = vrot.slane %v1130, 1
        %v1166 = vsel %vm1151, %v1164, %v1165
        %v1167 = vrot.slane %v1122, 1
        %v1168 = vrot.slane %v1131, 1
        %v1169 = vsel %vm1151, %v1167, %v1168
        %v1170 = vrot.slane %v1123, 1
        %v1171 = vrot.slane %v1132, 1
        %v1172 = vsel %vm1151, %v1170, %v1171
        %v1173 = vrot.slane %v1124, 1
        %v1174 = vrot.slane %v1133, 1
        %v1175 = vsel %vm1151, %v1173, %v1174
        %vm1176 = vcmask 1045504
        %v1177 = vrot.slane %v1117, 2
        %v1178 = vrot.slane %v1126, 2
        %v1179 = vsel %vm1176, %v1177, %v1178
        %v1180 = vrot.slane %v1118, 2
        %v1181 = vrot.slane %v1127, 2
        %v1182 = vsel %vm1176, %v1180, %v1181
        %v1183 = vrot.slane %v1119, 2
        %v1184 = vrot.slane %v1128, 2
        %v1185 = vsel %vm1176, %v1183, %v1184
        %v1186 = vrot.slane %v1120, 2
        %v1187 = vrot.slane %v1129, 2
        %v1188 = vsel %vm1176, %v1186, %v1187
        %v1189 = vrot.slane %v1121, 2
        %v1190 = vrot.slane %v1130, 2
        %v1191 = vsel %vm1176, %v1189, %v1190
        %v1192 = vrot.slane %v1122, 2
        %v1193 = vrot.slane %v1131, 2
        %v1194 = vsel %vm1176, %v1192, %v1193
        %v1195 = vrot.slane %v1123, 2
        %v1196 = vrot.slane %v1132, 2
        %v1197 = vsel %vm1176, %v1195, %v1196
        %v1198 = vrot.slane %v1124, 2
        %v1199 = vrot.slane %v1133, 2
        %v1200 = vsel %vm1176, %v1198, %v1199
        %v1203 = vrot.slane %v1125, 1
        %v1204 = vrot.slane %v1134, 1
        %v1205 = vsel %vm1151, %v1203, %v1204
        %v1206 = vrot.slane %v1125, 2
        %v1207 = vrot.slane %v1134, 2
        %v1208 = vsel %vm1176, %v1206, %v1207
        %1209 = vrot.lane.b32.xlu0 %v1154, 4
        %v1210 = vpop.permute.xlu0 %1209
        %1211 = vrot.lane.b32.xlu0 %v1157, 4
        %v1212 = vpop.permute.xlu0 %1211
        %1213 = vrot.lane.b32.xlu0 %v1160, 4
        %v1214 = vpop.permute.xlu0 %1213
        %1215 = vrot.lane.b32.xlu0 %v1163, 4
        %v1216 = vpop.permute.xlu0 %1215
        %1217 = vrot.lane.b32.xlu0 %v1166, 4
        %v1218 = vpop.permute.xlu0 %1217
        %1219 = vrot.lane.b32.xlu0 %v1169, 4
        %v1220 = vpop.permute.xlu0 %1219
        %1221 = vrot.lane.b32.xlu0 %v1172, 4
        %v1222 = vpop.permute.xlu0 %1221
        %1223 = vrot.lane.b32.xlu0 %v1175, 4
        %v1224 = vpop.permute.xlu0 %1223
        %1233 = vrot.lane.b32.xlu0 %v1179, 8
        %v1234 = vpop.permute.xlu0 %1233
        %1235 = vrot.lane.b32.xlu0 %v1182, 8
        %v1236 = vpop.permute.xlu0 %1235
        %1237 = vrot.lane.b32.xlu0 %v1185, 8
        %v1238 = vpop.permute.xlu0 %1237
        %1239 = vrot.lane.b32.xlu0 %v1188, 8
        %v1240 = vpop.permute.xlu0 %1239
        %1241 = vrot.lane.b32.xlu0 %v1191, 8
        %v1242 = vpop.permute.xlu0 %1241
        %1243 = vrot.lane.b32.xlu0 %v1194, 8
        %v1244 = vpop.permute.xlu0 %1243
        %1245 = vrot.lane.b32.xlu0 %v1197, 8
        %v1246 = vpop.permute.xlu0 %1245
        %1247 = vrot.lane.b32.xlu0 %v1200, 8
        %v1248 = vpop.permute.xlu0 %1247
        %1257 = vrot.lane.b32.xlu0 %v1118, 12
        %v1258 = vpop.permute.xlu0 %1257
        %1259 = vrot.lane.b32.xlu0 %v1119, 12
        %v1260 = vpop.permute.xlu0 %1259
        %1261 = vrot.lane.b32.xlu0 %v1120, 12
        %v1262 = vpop.permute.xlu0 %1261
        %1263 = vrot.lane.b32.xlu0 %v1121, 12
        %v1264 = vpop.permute.xlu0 %1263
        %1265 = vrot.lane.b32.xlu0 %v1122, 12
        %v1266 = vpop.permute.xlu0 %1265
        %1267 = vrot.lane.b32.xlu0 %v1123, 12
        %v1268 = vpop.permute.xlu0 %1267
        %1269 = vrot.lane.b32.xlu0 %v1124, 12
        %v1270 = vpop.permute.xlu0 %1269
        %1271 = vrot.lane.b32.xlu0 %v1125, 12
        %v1272 = vpop.permute.xlu0 %1271
        %1281 = vrot.lane.b32.xlu0 %v1157, 16
        %v1282 = vpop.permute.xlu0 %1281
        %1283 = vrot.lane.b32.xlu0 %v1160, 16
        %v1284 = vpop.permute.xlu0 %1283
        %1285 = vrot.lane.b32.xlu0 %v1163, 16
        %v1286 = vpop.permute.xlu0 %1285
        %1287 = vrot.lane.b32.xlu0 %v1166, 16
        %v1288 = vpop.permute.xlu0 %1287
        %1289 = vrot.lane.b32.xlu0 %v1169, 16
        %v1290 = vpop.permute.xlu0 %1289
        %1291 = vrot.lane.b32.xlu0 %v1172, 16
        %v1292 = vpop.permute.xlu0 %1291
        %1293 = vrot.lane.b32.xlu0 %v1175, 16
        %v1294 = vpop.permute.xlu0 %1293
        %1295 = vrot.lane.b32.xlu0 %v1205, 16
        %v1296 = vpop.permute.xlu0 %1295
        %1305 = vrot.lane.b32.xlu0 %v1182, 20
        %v1306 = vpop.permute.xlu0 %1305
        %1307 = vrot.lane.b32.xlu0 %v1185, 20
        %v1308 = vpop.permute.xlu0 %1307
        %1309 = vrot.lane.b32.xlu0 %v1188, 20
        %v1310 = vpop.permute.xlu0 %1309
        %1311 = vrot.lane.b32.xlu0 %v1191, 20
        %v1312 = vpop.permute.xlu0 %1311
        %1313 = vrot.lane.b32.xlu0 %v1194, 20
        %v1314 = vpop.permute.xlu0 %1313
        %1315 = vrot.lane.b32.xlu0 %v1197, 20
        %v1316 = vpop.permute.xlu0 %1315
        %1317 = vrot.lane.b32.xlu0 %v1200, 20
        %v1318 = vpop.permute.xlu0 %1317
        %1319 = vrot.lane.b32.xlu0 %v1208, 20
        %v1320 = vpop.permute.xlu0 %1319
        %1329 = vrot.lane.b32.xlu0 %v1119, 24
        %v1330 = vpop.permute.xlu0 %1329
        %1331 = vrot.lane.b32.xlu0 %v1120, 24
        %v1332 = vpop.permute.xlu0 %1331
        %1333 = vrot.lane.b32.xlu0 %v1121, 24
        %v1334 = vpop.permute.xlu0 %1333
        %1335 = vrot.lane.b32.xlu0 %v1122, 24
        %v1336 = vpop.permute.xlu0 %1335
        %1337 = vrot.lane.b32.xlu0 %v1123, 24
        %v1338 = vpop.permute.xlu0 %1337
        %1339 = vrot.lane.b32.xlu0 %v1124, 24
        %v1340 = vpop.permute.xlu0 %1339
        %1341 = vrot.lane.b32.xlu0 %v1125, 24
        %v1342 = vpop.permute.xlu0 %1341
        %1343 = vrot.lane.b32.xlu0 %v1117, 24
        %v1344 = vpop.permute.xlu0 %1343
        %1353 = vrot.lane.b32.xlu0 %v1160, 28
        %v1354 = vpop.permute.xlu0 %1353
        %1355 = vrot.lane.b32.xlu0 %v1163, 28
        %v1356 = vpop.permute.xlu0 %1355
        %1357 = vrot.lane.b32.xlu0 %v1166, 28
        %v1358 = vpop.permute.xlu0 %1357
        %1359 = vrot.lane.b32.xlu0 %v1169, 28
        %v1360 = vpop.permute.xlu0 %1359
        %1361 = vrot.lane.b32.xlu0 %v1172, 28
        %v1362 = vpop.permute.xlu0 %1361
        %1363 = vrot.lane.b32.xlu0 %v1175, 28
        %v1364 = vpop.permute.xlu0 %1363
        %1365 = vrot.lane.b32.xlu0 %v1205, 28
        %v1366 = vpop.permute.xlu0 %1365
        %1367 = vrot.lane.b32.xlu0 %v1154, 28
        %v1368 = vpop.permute.xlu0 %1367
        %1377 = vrot.lane.b32.xlu0 %v1185, 32
        %v1378 = vpop.permute.xlu0 %1377
        %1379 = vrot.lane.b32.xlu0 %v1188, 32
        %v1380 = vpop.permute.xlu0 %1379
        %1381 = vrot.lane.b32.xlu0 %v1191, 32
        %v1382 = vpop.permute.xlu0 %1381
        %1383 = vrot.lane.b32.xlu0 %v1194, 32
        %v1384 = vpop.permute.xlu0 %1383
        %1385 = vrot.lane.b32.xlu0 %v1197, 32
        %v1386 = vpop.permute.xlu0 %1385
        %1387 = vrot.lane.b32.xlu0 %v1200, 32
        %v1388 = vpop.permute.xlu0 %1387
        %1389 = vrot.lane.b32.xlu0 %v1208, 32
        %v1390 = vpop.permute.xlu0 %1389
        %1391 = vrot.lane.b32.xlu0 %v1179, 32
        %v1392 = vpop.permute.xlu0 %1391
        %vm1401 = vcmask 31744
        %v1402 = vsel %vm1401, %v1117, %v1210
        %v1403 = vsel %vm1401, %v1118, %v1212
        %v1404 = vsel %vm1401, %v1119, %v1214
        %v1405 = vsel %vm1401, %v1120, %v1216
        %v1406 = vsel %vm1401, %v1121, %v1218
        %v1407 = vsel %vm1401, %v1122, %v1220
        %v1408 = vsel %vm1401, %v1123, %v1222
        %v1409 = vsel %vm1401, %v1124, %v1224
        %vm1410 = vcmask 64512
        %v1411 = vsel %vm1410, %v1402, %v1234
        %v1412 = vsel %vm1410, %v1403, %v1236
        %v1413 = vsel %vm1410, %v1404, %v1238
        %v1414 = vsel %vm1410, %v1405, %v1240
        %v1415 = vsel %vm1410, %v1406, %v1242
        %v1416 = vsel %vm1410, %v1407, %v1244
        %v1417 = vsel %vm1410, %v1408, %v1246
        %v1418 = vsel %vm1410, %v1409, %v1248
        %vm1419 = vcmask 97280
        %v1420 = vsel %vm1419, %v1411, %v1258
        %v1421 = vsel %vm1419, %v1412, %v1260
        %v1422 = vsel %vm1419, %v1413, %v1262
        %v1423 = vsel %vm1419, %v1414, %v1264
        %v1424 = vsel %vm1419, %v1415, %v1266
        %v1425 = vsel %vm1419, %v1416, %v1268
        %v1426 = vsel %vm1419, %v1417, %v1270
        %v1427 = vsel %vm1419, %v1418, %v1272
        %vm1428 = vcmask 130048
        %v1429 = vsel %vm1428, %v1420, %v1282
        %v1430 = vsel %vm1428, %v1421, %v1284
        %v1431 = vsel %vm1428, %v1422, %v1286
        %v1432 = vsel %vm1428, %v1423, %v1288
        %v1433 = vsel %vm1428, %v1424, %v1290
        %v1434 = vsel %vm1428, %v1425, %v1292
        %v1435 = vsel %vm1428, %v1426, %v1294
        %v1436 = vsel %vm1428, %v1427, %v1296
        %vm1437 = vcmask 162816
        %v1438 = vsel %vm1437, %v1429, %v1306
        %v1439 = vsel %vm1437, %v1430, %v1308
        %v1440 = vsel %vm1437, %v1431, %v1310
        %v1441 = vsel %vm1437, %v1432, %v1312
        %v1442 = vsel %vm1437, %v1433, %v1314
        %v1443 = vsel %vm1437, %v1434, %v1316
        %v1444 = vsel %vm1437, %v1435, %v1318
        %v1445 = vsel %vm1437, %v1436, %v1320
        %vm1446 = vcmask 195584
        %v1447 = vsel %vm1446, %v1438, %v1330
        %v1448 = vsel %vm1446, %v1439, %v1332
        %v1449 = vsel %vm1446, %v1440, %v1334
        %v1450 = vsel %vm1446, %v1441, %v1336
        %v1451 = vsel %vm1446, %v1442, %v1338
        %v1452 = vsel %vm1446, %v1443, %v1340
        %v1453 = vsel %vm1446, %v1444, %v1342
        %v1454 = vsel %vm1446, %v1445, %v1344
        %vm1455 = vcmask 228352
        %v1456 = vsel %vm1455, %v1447, %v1354
        %v1457 = vsel %vm1455, %v1448, %v1356
        %v1458 = vsel %vm1455, %v1449, %v1358
        %v1459 = vsel %vm1455, %v1450, %v1360
        %v1460 = vsel %vm1455, %v1451, %v1362
        %v1461 = vsel %vm1455, %v1452, %v1364
        %v1462 = vsel %vm1455, %v1453, %v1366
        %v1463 = vsel %vm1455, %v1454, %v1368
        %vm1464 = vcmask 261120
        %v1465 = vsel %vm1464, %v1456, %v1378
        %v1466 = vsel %vm1464, %v1457, %v1380
        %v1467 = vsel %vm1464, %v1458, %v1382
        %v1468 = vsel %vm1464, %v1459, %v1384
        %v1469 = vsel %vm1464, %v1460, %v1386
        %v1470 = vsel %vm1464, %v1461, %v1388
        %v1471 = vsel %vm1464, %v1462, %v1390
        %v1472 = vsel %vm1464, %v1463, %v1392
        %v1473 = vpack.c.bf16 %v1466, %v1465
        %v1474 = vpack.c.bf16 %v1468, %v1467
        %v1475 = vpack.c.bf16 %v1470, %v1469
        %v1476 = vpack.c.bf16 %v1472, %v1471
        %v1477 = vld [vmem:[%s1] sm:$0xf]
        %v1478 = vld [vmem:[%s1 + $0x4] sm:$0xf]
        %v1479 = vld [vmem:[%s1 + $0x8] sm:$0xf]
        %v1480 = vld [vmem:[%s1 + $0xc] sm:$0xf]
        %v1481 = vld [vmem:[%s1 + $0x10] sm:$0x3]
        %v1482 = vld [vmem:[%s2] sm:$0x1]
        %v1484 = vlaneseq
        %v1485 = vshrl.u32 %v1484, 7
        %v1486 = vsub.s32 0, %v1485
        %v1487 = vrot.slane %v1482, %v1486
        %v1494 = vunpack.c.l.b16 %v1477
        %v1495 = vunpack.c.l.b16 %v1478
        %v1496 = vunpack.c.l.b16 %v1479
        %v1497 = vunpack.c.l.b16 %v1480
        %v1498 = vunpack.c.l.b16 %v1481
        %v1499 = vpack.c.b16 %v1495, %v1494
        %v1500 = vpack.c.b16 %v1497, %v1496
        %v1501 = vpack.c.b16 %v1498, %v1498
        %vm1504 = vcmask 293888
        %v1506 = vsel %vm1504, %v1473, 0
        %v1509 = vsel %vm1504, %v1474, 0
        %v1512 = vsel %vm1504, %v1475, 0
        %v1515 = vsel %vm1504, %v1476, 0
        %vm1517 = vcmask 1041408
        %v1519 = vsel %vm1517, %v1501, 0
        %1521 = vmatprep.subr.bf16.mxu0 0
        %1522 = vmatpush1.bf16.msra.mxu0 %v1499
        %1523 = vmatprep.subr.bf16.mxu0 0
        %1524 = vmatpush1.bf16.msra.mxu0 %v1500
        %1525 = vmatprep.subr.bf16.mxu0 0
        %1526 = vmatpush1.bf16.msra.mxu0 %v1519
        %1527 = vmatprep.subr.bf16.mxu0 0
        %1528 = vmatpush1.bf16.msra.mxu0 0
        %1529 = vmatprep.subr.bf16.mxu0 0
        %1530 = vmatpush1.bf16.msra.mxu0 0
        %1531 = vmatprep.subr.bf16.mxu0 0
        %1532 = vmatpush1.bf16.msra.mxu0 0
        %1533 = vmatprep.subr.bf16.mxu0 0
        %1534 = vmatpush1.bf16.msra.mxu0 0
        %1535 = vmatprep.subr.bf16.mxu0 0
        %1536 = vmatpush1.bf16.msra.mxu0 0
        %1537 = vmatprep.subr.bf16.mxu0 0
        %1538 = vmatpush1.bf16.msra.mxu0 0
        %1539 = vmatprep.subr.bf16.mxu0 0
        %1540 = vmatpush1.bf16.msra.mxu0 0
        %1541 = vmatprep.subr.bf16.mxu0 0
        %1542 = vmatpush1.bf16.msra.mxu0 0
        %1543 = vmatprep.subr.bf16.mxu0 0
        %1544 = vmatpush1.bf16.msra.mxu0 0
        %1545 = vmatprep.subr.bf16.mxu0 0
        %1546 = vmatpush1.bf16.msra.mxu0 0
        %1547 = vmatprep.subr.bf16.mxu0 0
        %1548 = vmatpush1.bf16.msra.mxu0 0
        %1549 = vmatprep.subr.bf16.mxu0 0
        %1550 = vmatpush1.bf16.msra.mxu0 0
        %1551 = vmatprep.subr.bf16.mxu0 0
        %1552 = vmatpush1.bf16.msra.mxu0 0
        %1553 = vmatprep.mubr.bf16.mxu0 0
        %1554 = vmatmul.mubr.bf16.gmra.mrb[0].mxu0 %v1506
        %v1555 = vpop.f32.mrb[0].mxu0
        %v1556 = vadd.f32 %v1487, %v1555
        %v1557 = vpop.f32.mrb[0].mxu0
        %v1558 = vpop.f32.mrb[0].mxu0
        %v1559 = vadd.f32 %v1487, %v1558
        %v1560 = vpop.f32.mrb[0].mxu0
        %1561 = vmatprep.mubr.bf16.mxu0 0
        %1562 = vmatmul.mubr.bf16.gmra.mrb[0].mxu0 %v1509
        %v1563 = vpop.f32.mrb[0].mxu0
        %v1564 = vadd.f32 %v1487, %v1563
        %v1565 = vpop.f32.mrb[0].mxu0
        %v1566 = vpop.f32.mrb[0].mxu0
        %v1567 = vadd.f32 %v1487, %v1566
        %v1568 = vpop.f32.mrb[0].mxu0
        %1569 = vmatprep.mubr.bf16.mxu0 0
        %1570 = vmatmul.mubr.bf16.gmra.mrb[0].mxu0 %v1512
        %v1571 = vpop.f32.mrb[0].mxu0
        %v1572 = vadd.f32 %v1487, %v1571
        %v1573 = vpop.f32.mrb[0].mxu0
        %v1574 = vpop.f32.mrb[0].mxu0
        %v1575 = vadd.f32 %v1487, %v1574
        %v1576 = vpop.f32.mrb[0].mxu0
        %1577 = vmatprep.mubr.bf16.mxu0 0
        %1578 = vmatmul.mubr.bf16.gmra.mrb[0].mxu0 %v1515
        %v1579 = vpop.f32.mrb[0].mxu0
        %v1580 = vadd.f32 %v1487, %v1579
        %v1581 = vpop.f32.mrb[0].mxu0
        %v1582 = vpop.f32.mrb[0].mxu0
        %v1583 = vadd.f32 %v1487, %v1582
        %v1584 = vpop.f32.mrb[0].mxu0
        %1585 = vdwg.mxu0
        %1586 = vst.msk [vmem:[%s208] sm:$0xff] %vm1410, %v1556
        %1587 = vst.msk [vmem:[%s208 + $0x8] sm:$0xff] %vm1410, %v1559
        %1588 = vst.msk [vmem:[%s208 + $0x10] sm:$0xff] %vm1410, %v1564
        %1589 = vst.msk [vmem:[%s208 + $0x18] sm:$0xff] %vm1410, %v1567
        %1590 = vst.msk [vmem:[%s208 + $0x20] sm:$0xff] %vm1410, %v1572
        %1591 = vst.msk [vmem:[%s208 + $0x28] sm:$0xff] %vm1410, %v1575
        %1592 = vst.msk [vmem:[%s208 + $0x30] sm:$0xff] %vm1410, %v1580
        %1593 = vst.msk [vmem:[%s208 + $0x38] sm:$0xff] %vm1410, %v1583
        %v1594 = vsel %vm1410, %v1556, 0.0
        %v1595 = vsel %vm1410, %v1559, 0.0
        %v1596 = vadd.f32 %v1594, %v1595
        %v1597 = vsel %vm1410, %v1564, 0.0
        %v1598 = vadd.f32 %v1596, %v1597
        %v1599 = vsel %vm1410, %v1567, 0.0
        %v1600 = vadd.f32 %v1598, %v1599
        %v1601 = vsel %vm1410, %v1572, 0.0
        %v1602 = vadd.f32 %v1600, %v1601
        %v1603 = vsel %vm1410, %v1575, 0.0
        %v1604 = vadd.f32 %v1602, %v1603
        %v1605 = vsel %vm1410, %v1580, 0.0
        %v1606 = vadd.f32 %v1604, %v1605
        %v1607 = vsel %vm1410, %v1583, 0.0
        %v1608 = vadd.f32 %v1606, %v1607
        %v1609 = vrot.slane %v1608, 4
        %v1610 = vadd.f32 %v1608, %v1609
        %v1611 = vrot.slane %v1610, 2
        %v1612 = vadd.f32 %v1610, %v1611
        %v1613 = vrot.slane %v1612, 1
        %v1614 = vadd.f32 %v1612, %v1613
        %v1615 = vmul.f32 %v1556, %v1556
        %v1616 = vmul.f32 %v1559, %v1559
        %v1617 = vmul.f32 %v1564, %v1564
        %v1618 = vmul.f32 %v1567, %v1567
        %v1619 = vmul.f32 %v1572, %v1572
        %v1620 = vmul.f32 %v1575, %v1575
        %v1621 = vmul.f32 %v1580, %v1580
        %v1622 = vmul.f32 %v1583, %v1583
        %v1623 = vsel %vm1410, %v1615, 0.0
        %v1624 = vsel %vm1410, %v1616, 0.0
        %v1625 = vadd.f32 %v1623, %v1624
        %v1626 = vsel %vm1410, %v1617, 0.0
        %v1627 = vadd.f32 %v1625, %v1626
        %v1628 = vsel %vm1410, %v1618, 0.0
        %v1629 = vadd.f32 %v1627, %v1628
        %v1630 = vsel %vm1410, %v1619, 0.0
        %v1631 = vadd.f32 %v1629, %v1630
        %v1632 = vsel %vm1410, %v1620, 0.0
        %v1633 = vadd.f32 %v1631, %v1632
        %v1634 = vsel %vm1410, %v1621, 0.0
        %v1635 = vadd.f32 %v1633, %v1634
        %v1636 = vsel %vm1410, %v1622, 0.0
        %v1637 = vadd.f32 %v1635, %v1636
        %v1638 = vrot.slane %v1637, 4
        %v1639 = vadd.f32 %v1637, %v1638
        %v1640 = vrot.slane %v1639, 2
        %v1641 = vadd.f32 %v1639, %v1640
        %v1642 = vrot.slane %v1641, 1
        %v1643 = vadd.f32 %v1641, %v1642
        %v1644 = vsel %vm1116, %v1614, %v1643
        %vm1645 = vcmask 58368
        %1646 = vst.msk [vmem:[%s198] sm:$0x3] %vm1645, %v1644
        %p1647 = scmp.lt.s32.totalorder %s19, 1
        %s1648 = scalar_select %p1647, %s19, 1
        %s1649 = smul.addr %s1648, 8
        %s1650 = smul.addr %s1649, 8
        %s1651 = scalar_lea.vmem %s3, %s1650
        %s1652 = sand.u32 %s121, 1
        %s1653 = scalar_lea.sflag [#allocation3], %s1652
        %s1654 = sand.u32 %s121, 1
        %s1655 = smul.addr %s1654, 2
        %s1656 = scalar_lea.vmem [#allocation2], %s1655
        // Predicated region
        $region33: #{tpu_custom_call.1} parent=31 // pred_check
          %p1657 = pneg %p105
        $region34: #{tpu_custom_call.1} parent=31 // pred_check_branch
          %1659 = sbr.rel (%p1657) target = $region36
        $region35: #{tpu_custom_call.1} parent=31 // pred_region
          _
        $region36: #{tpu_custom_call.1} parent=31 // pred_fallthru
          _
        // Predicated region
        $region37: #{tpu_custom_call.1} parent=31 // pred_check
          %p1660 = pneg %p131
        $region38: #{tpu_custom_call.1} parent=31 // pred_check_branch
          %1662 = sbr.rel (%p1660) target = $region40
        $region39: #{tpu_custom_call.1} parent=31 // pred_region
          %s1664 = ssub.s32 32, 32
          %1665 = vsyncadd %s1653, %s1664
          %s1666 = smul.addr %s19, 32
          %s1667 = scalar_lea.hbm %s4, %s1666
          %s1669 = sshll.u32 %s1656, 4
          %s1670 = int_to_ptr.vmem [resolvable:$true] %s1669
          %1672 = dma.vmem_to_hbm [thread:$0]  %s1670, 32, %s1667, %s1653
        $region40: #{tpu_custom_call.1} parent=31 // pred_fallthru
          _
      $region32: #{tpu_custom_call.1} parent=5 // pred_fallthru
        _
      %p1673 = scmp.le.s32.totalorder 2, %s14
      // Predicated region
      $region41: #{tpu_custom_call.1} parent=5 // pred_check
        %p1674 = pneg %p1673
      $region42: #{tpu_custom_call.1} parent=5 // pred_check_branch
        %1676 = sbr.rel (%p1674) target = $region44
      $region43: #{tpu_custom_call.1} parent=5 // pred_region
        %s1677 = ssub.s32 %s14, 2
        // Predicated region
        $region45: #{tpu_custom_call.1} parent=43 // pred_check
          %p1678 = pneg %p111
        $region46: #{tpu_custom_call.1} parent=43 // pred_check_branch
          %1680 = sbr.rel (%p1678) target = $region48
        $region47: #{tpu_custom_call.1} parent=43 // pred_region
          %p1681 = scmp.lt.s32.totalorder %s20, 1
          %s1682 = scalar_select %p1681, %s20, 1
          %s1683 = smul.addr %s1682, 8
          %s1684 = smul.addr %s1683, 8
          %s1685 = scalar_lea.vmem %s3, %s1684
        $region48: #{tpu_custom_call.1} parent=43 // pred_fallthru
          _
        // Predicated region
        $region49: #{tpu_custom_call.1} parent=43 // pred_check
          %p1686 = pneg %p137
        $region50: #{tpu_custom_call.1} parent=43 // pred_check_branch
          %1688 = sbr.rel (%p1686) target = $region52
        $region51: #{tpu_custom_call.1} parent=43 // pred_region
          %s1689 = sand.u32 %s122, 1
          %s1690 = scalar_lea.sflag [#allocation3], %s1689
          %s1691 = sand.u32 %s122, 1
          %s1692 = smul.addr %s1691, 2
          %s1693 = scalar_lea.vmem [#allocation2], %s1692
          %1694 = dma.done %s1690, 32
        $region52: #{tpu_custom_call.1} parent=43 // pred_fallthru
          _
      $region44: #{tpu_custom_call.1} parent=5 // pred_fallthru
        _
    $region6: #{tpu_custom_call.1} parent=1 // loop_footer
      %s18 = sadd.s32 1, %s14
    $region7: #{tpu_custom_call.1} parent=1 // loop_footer_branch
      %13 = sbr.rel target = $region3
    $region8: #{tpu_custom_call.1} parent=1 // loop_exit
      _
    %1695 = vsyncpa [#allocation3], 1
    %s1696 = scalar_lea.sflag [#allocation3], 1
    %1697 = vsyncpa %s1696, 1

</llo_original>
